<compile_context>
chip_gen: v7x
topology: tpu7x:2x2x1
jax: 0.10.0
libtpu: 0.0.40
codegen_flags: <defaults>
</compile_context>

<pallas_src>
import numpy as np
import jax
import jax.numpy as jnp
from jax.experimental import pallas as pl
from jax.experimental.pallas import tpu as pltpu

_LANES = 128


def _round_up(a, m):
    return ((a + m - 1) // m) * m


def _deinterleave_perm(c):
    """(C*128, C*128) 0/1 matrix mapping interleaved lanes -> C contiguous 128-lane slabs."""
    n = c * _LANES
    p = np.zeros((n, n), dtype=np.float32)
    lane = np.arange(n)                       # input lane l = pixel*C + channel
    p[lane, (lane % c) * _LANES + (lane // c)] = 1.0
    return p


def numpy_normalize(img_hwc, mean, std):
    """img_hwc: (H, W, C) image, uint8 (PIL-style) or float in [0, 255].
    Returns (C, H, W) float32: ((img / 255) - mean) / std, channels-first."""
    x = jnp.asarray(img_hwc)
    # Only exotic dtypes get a wrapper cast; u8 / f32 / bf16 / f16 stream into the kernel as-is.
    if x.dtype not in (jnp.uint8, jnp.float32, jnp.bfloat16, jnp.float16):
        x = x.astype(jnp.float32)
    H, W, C = x.shape
    lanes_c = C * _LANES

    mean_np = np.asarray(mean, dtype=np.float32).reshape(-1)
    std_np = np.asarray(std, dtype=np.float32).reshape(-1)
    # Fold (x/255 - mean)/std into a single multiply-add, baked in as trace-time constants.
    scale = [float(v) for v in (1.0 / (255.0 * std_np))]
    bias = [float(v) for v in (-mean_np / std_np)]

    L = H * W
    n_rows = pl.cdiv(L, _LANES)
    l_pad = n_rows * _LANES

    flat = x.reshape(-1)                                # (H*W*C,) channel-interleaved view (free)
    if l_pad != L:
        # TODO(synk): handle the ragged tail inside the kernel (1-D ragged block) to drop this pad pass.
        flat = jnp.pad(flat, (0, (l_pad - L) * C))
    x_tiles = flat.reshape(n_rows, lanes_c)             # lane-dense view (free reshape)

    perm = jnp.asarray(_deinterleave_perm(C), dtype=jnp.bfloat16)

    # Row-tile sizing: one step for small images; >=2 balanced tiles (v7x megacore) for big ones;
    # dtype-aware cap keeps the double-buffered footprint well under every generation's VMEM limit.
    max_rows = 2048 if x.dtype == jnp.uint8 else 1024
    n_target = 1 if n_rows < 1024 else max(2, pl.cdiv(n_rows, max_rows))
    rows_per_tile = min(n_rows, _round_up(pl.cdiv(n_rows, n_target), 32))
    n_tiles = pl.cdiv(n_rows, rows_per_tile)

    # uint8/bf16 values are exact in bf16 -> one permute matmul; f32/f16 need a 3-term bf16 split.
    n_terms = 1 if x.dtype in (jnp.uint8, jnp.bfloat16) else 3

    def kernel(x_ref, p_ref, o_ref):
        p = p_ref[...]
        xf = x_ref[...].astype(jnp.float32)             # in-kernel cast: 1 B/elem HBM read for u8
        t = xf.astype(jnp.bfloat16)
        # Deinterleave channels on the MXU: y[:, c*128 + q] == x[:, q*C + c] (0/1 matrix, exact).
        y = jnp.dot(t, p, preferred_element_type=jnp.float32)
        res = xf
        for _ in range(n_terms - 1):                    # bf16 hi/lo/lo2 split for float inputs
            res = res - t.astype(jnp.float32)
            t = res.astype(jnp.bfloat16)
            y = y + jnp.dot(t, p, preferred_element_type=jnp.float32)
        for c in range(C):                              # static 128-aligned lane slices -> dense stores
            o_ref[c] = y[:, c * _LANES:(c + 1) * _LANES] * scale[c] + bias[c]

    bytes_accessed = (x_tiles.size * x_tiles.dtype.itemsize
                      + C * n_rows * _LANES * 4 + perm.size * 2)
    flops = 2 * n_rows * lanes_c * lanes_c * n_terms + 2 * C * n_rows * _LANES

    out = pl.pallas_call(
        kernel,
        out_shape=jax.ShapeDtypeStruct((C, n_rows, _LANES), jnp.float32),
        grid_spec=pltpu.PrefetchScalarGridSpec(
            num_scalar_prefetch=0,
            grid=(n_tiles,),
            in_specs=[
                pl.BlockSpec((rows_per_tile, lanes_c), lambda i: (i, 0)),   # image row tile
                pl.BlockSpec((lanes_c, lanes_c), lambda i: (0, 0)),         # resident permutation
            ],
            out_specs=pl.BlockSpec((C, rows_per_tile, _LANES), lambda i: (0, i, 0)),
        ),
        compiler_params=pltpu.CompilerParams(
            dimension_semantics=("parallel",),
            vmem_limit_bytes=32 * 1024 * 1024),
        cost_estimate=pl.CostEstimate(flops=int(flops), transcendentals=0,
                                      bytes_accessed=int(bytes_accessed)),
    )(x_tiles, perm)

    if l_pad == L:
        return out.reshape(C, H, W)                     # contiguous -> free reshape
    # TODO(synk): emit the exact (C, H*W) output with masked edge stores to drop this slice pass.
    return out.reshape(C, l_pad)[:, :L].reshape(C, H, W)


def _reference(img_hwc, mean, std):
    x = jnp.transpose(jnp.asarray(img_hwc).astype(jnp.float32), (2, 0, 1)) / 255.0
    x = x - jnp.asarray(mean, jnp.float32).reshape(-1, 1, 1)
    return x / jnp.asarray(std, jnp.float32).reshape(-1, 1, 1)


if __name__ == "__main__":
    # Deterministic "module parameters": standard per-channel mean / std.
    mean = (0.485, 0.456, 0.406)
    std = (0.229, 0.224, 0.225)

    key = jax.random.PRNGKey(0)
    k1, k2, k3 = jax.random.split(key, 3)

    # Case 1: uint8 PIL-style image, H*W a multiple of 128 (fully fused, single grid step).
    H1, W1, C = 16, 16, 3
    img_u8 = jax.random.randint(k1, (H1, W1, C), 0, 256, dtype=jnp.int32).astype(jnp.uint8)
    out1 = jax.block_until_ready(numpy_normalize(img_u8, mean, std))
    ref1 = _reference(img_u8, mean, std)
    assert out1.shape == (C, H1, W1)
    assert jnp.allclose(out1, ref1, atol=1e-5, rtol=1e-5)

    # Case 2: float32 image in [0, 255], H*W NOT a multiple of 128 (pad/slice fallback, 3-term split).
    H2, W2 = 24, 40
    img_f32 = jax.random.uniform(k2, (H2, W2, C), dtype=jnp.float32) * 255.0
    out2 = jax.block_until_ready(numpy_normalize(img_f32, mean, std))
    ref2 = _reference(img_f32, mean, std)
    assert out2.shape == (C, H2, W2)
    assert jnp.allclose(out2, ref2, atol=1e-5, rtol=1e-5)

    # Case 3: larger uint8 image exercising the multi-tile grid (2 balanced row tiles).
    H3, W3 = 384, 384
    img_u8_big = jax.random.randint(k3, (H3, W3, C), 0, 256, dtype=jnp.int32).astype(jnp.uint8)
    out3 = jax.block_until_ready(numpy_normalize(img_u8_big, mean, std))
    ref3 = _reference(img_u8_big, mean, std)
    assert out3.shape == (C, H3, W3)
    assert jnp.allclose(out3, ref3, atol=1e-5, rtol=1e-5)

    print("KERNEL_OK")
</pallas_src>

<mosaic_0001>
module attributes {stable_mosaic.version = 11 : i64} {
  func.func @kernel(%arg0: i32, %arg1: memref<2x384xi8, #tpu.memory_space<vmem>>, %arg2: memref<384x384xbf16, #tpu.memory_space<vmem>>, %arg3: memref<3x2x128xf32, #tpu.memory_space<vmem>>) attributes {dimension_semantics = [#tpu.dimension_semantics<parallel>], iteration_bounds = array<i64: 1>, scalar_prefetch = 0 : i64, scratch_operands = 0 : i64, tpu.core_type = #tpu.core_type<tc>, window_params = [{transform_indices = @transform_0, window_bounds = array<i64: 2, 384>}, {pipeline_mode = #tpu.pipeline_mode<synchronous>, transform_indices = @transform_1, window_bounds = array<i64: 384, 384>}, {transform_indices = @transform_2, window_bounds = array<i64: 3, 2, 128>}]} {
    %c0 = arith.constant 0 : index
    %c0_0 = arith.constant 0 : index
    %0 = vector.load %arg2[%c0, %c0_0] : memref<384x384xbf16, #tpu.memory_space<vmem>>, vector<384x384xbf16>
    %c0_1 = arith.constant 0 : index
    %c0_2 = arith.constant 0 : index
    %1 = vector.load %arg1[%c0_1, %c0_2] : memref<2x384xi8, #tpu.memory_space<vmem>>, vector<2x384xi8>
    %2 = arith.uitofp %1 : vector<2x384xi8> to vector<2x384xf32>
    %3 = arith.truncf %2 : vector<2x384xf32> to vector<2x384xbf16>
    %cst = arith.constant dense<0.000000e+00> : vector<2x384xf32>
    %4 = tpu.matmul %3, %0, %cst {dimension_numbers = #tpu.dot_dimension_numbers<[1], [0], [0], [1], [0, 0, 1, 1], [], []>} : vector<2x384xbf16>, vector<384x384xbf16>, vector<2x384xf32> -> vector<2x384xf32>
    %5 = vector.extract_strided_slice %4 {offsets = [0, 0], sizes = [2, 128], strides = [1, 1]} : vector<2x384xf32> to vector<2x128xf32>
    %cst_3 = arith.constant 0.0171247534 : f32
    %6 = vector.broadcast %cst_3 : f32 to vector<2x128xf32>
    %7 = arith.mulf %5, %6 : vector<2x128xf32>
    %cst_4 = arith.constant -2.11790395 : f32
    %8 = vector.broadcast %cst_4 : f32 to vector<2x128xf32>
    %9 = arith.addf %7, %8 : vector<2x128xf32>
    %c0_5 = arith.constant 0 : index
    %c0_6 = arith.constant 0 : index
    %c0_7 = arith.constant 0 : index
    %10 = vector.load %arg3[%c0_5, %c0_6, %c0_7] : memref<3x2x128xf32, #tpu.memory_space<vmem>>, vector<1x2x128xf32>
    %11 = vector.shape_cast %10 : vector<1x2x128xf32> to vector<2x128xf32>
    %12 = vector.shape_cast %9 : vector<2x128xf32> to vector<1x2x128xf32>
    tpu.vector_store %arg3[%c0_5, %c0_6, %c0_7], %12 {strides = array<i32>} : memref<3x2x128xf32, #tpu.memory_space<vmem>>, vector<1x2x128xf32>,
    %13 = vector.extract_strided_slice %4 {offsets = [0, 128], sizes = [2, 128], strides = [1, 1]} : vector<2x384xf32> to vector<2x128xf32>
    %cst_8 = arith.constant 0.0175070018 : f32
    %14 = vector.broadcast %cst_8 : f32 to vector<2x128xf32>
    %15 = arith.mulf %13, %14 : vector<2x128xf32>
    %cst_9 = arith.constant -2.03571415 : f32
    %16 = vector.broadcast %cst_9 : f32 to vector<2x128xf32>
    %17 = arith.addf %15, %16 : vector<2x128xf32>
    %c1 = arith.constant 1 : index
    %c0_10 = arith.constant 0 : index
    %c0_11 = arith.constant 0 : index
    %18 = vector.load %arg3[%c1, %c0_10, %c0_11] : memref<3x2x128xf32, #tpu.memory_space<vmem>>, vector<1x2x128xf32>
    %19 = vector.shape_cast %18 : vector<1x2x128xf32> to vector<2x128xf32>
    %20 = vector.shape_cast %17 : vector<2x128xf32> to vector<1x2x128xf32>
    tpu.vector_store %arg3[%c1, %c0_10, %c0_11], %20 {strides = array<i32>} : memref<3x2x128xf32, #tpu.memory_space<vmem>>, vector<1x2x128xf32>,
    %21 = vector.extract_strided_slice %4 {offsets = [0, 256], sizes = [2, 128], strides = [1, 1]} : vector<2x384xf32> to vector<2x128xf32>
    %cst_12 = arith.constant 0.0174291935 : f32
    %22 = vector.broadcast %cst_12 : f32 to vector<2x128xf32>
    %23 = arith.mulf %21, %22 : vector<2x128xf32>
    %cst_13 = arith.constant -1.80444443 : f32
    %24 = vector.broadcast %cst_13 : f32 to vector<2x128xf32>
    %25 = arith.addf %23, %24 : vector<2x128xf32>
    %c2 = arith.constant 2 : index
    %c0_14 = arith.constant 0 : index
    %c0_15 = arith.constant 0 : index
    %26 = vector.load %arg3[%c2, %c0_14, %c0_15] : memref<3x2x128xf32, #tpu.memory_space<vmem>>, vector<1x2x128xf32>
    %27 = vector.shape_cast %26 : vector<1x2x128xf32> to vector<2x128xf32>
    %28 = vector.shape_cast %25 : vector<2x128xf32> to vector<1x2x128xf32>
    tpu.vector_store %arg3[%c2, %c0_14, %c0_15], %28 {strides = array<i32>} : memref<3x2x128xf32, #tpu.memory_space<vmem>>, vector<1x2x128xf32>,
    return
  }
  func.func @transform_0(%arg0: i32) -> (i32, i32) {
    %c0_i32 = arith.constant 0 : i32
    %c0_i32_0 = arith.constant 0 : i32
    return %arg0, %c0_i32 : i32, i32
  }
  func.func @transform_1(%arg0: i32) -> (i32, i32) {
    %c0_i32 = arith.constant 0 : i32
    %c0_i32_0 = arith.constant 0 : i32
    %c0_i32_1 = arith.constant 0 : i32
    return %c0_i32, %c0_i32_0 : i32, i32
  }
  func.func @transform_2(%arg0: i32) -> (i32, i32, i32) {
    %c0_i32 = arith.constant 0 : i32
    %c0_i32_0 = arith.constant 0 : i32
    %c0_i32_1 = arith.constant 0 : i32
    return %c0_i32, %arg0, %c0_i32_0 : i32, i32, i32
  }
}

</mosaic_0001>

<llo_original>
// kernel: tpu_custom_call.1
$region0: #{tpu_custom_call.1}
  #allocation0 [shape = 'u32[]', space=smem, size = 0x4, offset = 0x4, fixed_abs, tag = 'smem constant byte address 0x4 - core index']
  #allocation1 [shape = 'u32[144,128]{1,0:T(1,128)}', space=vmem, size = 0x12000, scoped, tag = 'internal scratch']
  %s0 = inlined_call_operand.hbm [shape: u8[2,384], index: 0, kind: input, shape index: {}]
  %s1 = inlined_call_operand.hbm [shape: bf16[384,384], index: 1, kind: input, shape index: {}]
  %s2 = inlined_call_operand.hbm [shape: f32[3,2,128], index: 2, kind: output, shape index: {}]
  %s3 = sld [smem:[#allocation0]]
  $region26: #{tpu_custom_call.1} parent=0
    _
  %s5 = ssub.s32 1, %s3
  %s6 = scalar_select 0, %s5, %s3
  $region1: #{tpu_custom_call.1} parent=0
    #allocation2 [shape = 'u8[1536]{0}', space=vmem, size = 0x800, scoped, tag = 'input window, operand 0, single buffered']
    #allocation3 [shape = 's32[1]{0}', space=sflag, size = 0x4, scoped, tag = 'scoped memory for tpu_custom_call.1']
    #allocation4 [shape = 's32[1]{0}', space=sflag, size = 0x4, scoped, tag = 'scoped memory for tpu_custom_call.1']
    #allocation5 [shape = 'u8[294912]{0}', space=vmem, size = 0x48000, scoped, tag = 'input window, operand 1, single buffered']
    #allocation6 [shape = 's32[1]{0}', space=sflag, size = 0x4, scoped, tag = 'scoped memory for tpu_custom_call.1']
    #allocation7 [shape = 'u8[3072]{0}', space=vmem, size = 0xc00, scoped, tag = 'output window, operand 0, single buffered']
    %7 = vsyncpa [#allocation3], 0
    %8 = vsyncpa [#allocation6], 0
    %9 = vsyncpa [#allocation4], 0
    // Predicated region
    $region2: #{tpu_custom_call.1} parent=1 // pred_check
      _
    $region3: #{tpu_custom_call.1} parent=1 // pred_check_branch
      %11 = sbr.rel (0) target = $region5
    $region4: #{tpu_custom_call.1} parent=1 // pred_region
      %s13 = ssub.s32 48, 48
      %14 = vsyncadd [#allocation3], %s13
      %s16 = sshll.u32 [#allocation2], 4
      %s17 = int_to_ptr.vmem [resolvable:$true] %s16
      %19 = dma.hbm_to_vmem [thread:$0]  %s0, 48, %s17, [#allocation3]
    $region5: #{tpu_custom_call.1} parent=1 // pred_fallthru
      _
    // Predicated region
    $region6: #{tpu_custom_call.1} parent=1 // pred_check
      _
    $region7: #{tpu_custom_call.1} parent=1 // pred_check_branch
      %21 = sbr.rel (0) target = $region9
    $region8: #{tpu_custom_call.1} parent=1 // pred_region
      %s23 = ssub.s32 9216, 9216
      %24 = vsyncadd [#allocation6], %s23
      %s25 = sshll.u32 [#allocation5], 4
      %s26 = int_to_ptr.vmem [resolvable:$true] %s25
      %31 = dma.hbm_to_vmem [thread:$0]  %s1, 9216, %s26, [#allocation6], 192, 192, 12
    $region9: #{tpu_custom_call.1} parent=1 // pred_fallthru
      _
    // Predicated region
    $region10: #{tpu_custom_call.1} parent=1 // pred_check
      _
    $region11: #{tpu_custom_call.1} parent=1 // pred_check_branch
      %33 = sbr.rel (0) target = $region13
    $region12: #{tpu_custom_call.1} parent=1 // pred_region
      %34 = dma.done [#allocation3], 48
    $region13: #{tpu_custom_call.1} parent=1 // pred_fallthru
      _
    // Predicated region
    $region14: #{tpu_custom_call.1} parent=1 // pred_check
      _
    $region15: #{tpu_custom_call.1} parent=1 // pred_check_branch
      %36 = sbr.rel (0) target = $region17
    $region16: #{tpu_custom_call.1} parent=1 // pred_region
      %37 = dma.done [#allocation6], 9216
    $region17: #{tpu_custom_call.1} parent=1 // pred_fallthru
      _
    %v39 = vld [vmem:[#allocation5] sm:$0xff]
    %v40 = vld [vmem:[#allocation5 + $0x8] sm:$0xf]
    %v41 = vld [vmem:[#allocation5 + $0xc] sm:$0xff]
    %v42 = vld [vmem:[#allocation5 + $0x14] sm:$0xf]
    %v43 = vld [vmem:[#allocation5 + $0x18] sm:$0xff]
    %v44 = vld [vmem:[#allocation5 + $0x20] sm:$0xf]
    %v45 = vld [vmem:[#allocation5 + $0x24] sm:$0xff]
    %v46 = vld [vmem:[#allocation5 + $0x2c] sm:$0xf]
    %v47 = vld [vmem:[#allocation5 + $0x30] sm:$0xff]
    %v48 = vld [vmem:[#allocation5 + $0x38] sm:$0xf]
    %v49 = vld [vmem:[#allocation5 + $0x3c] sm:$0xff]
    %v50 = vld [vmem:[#allocation5 + $0x44] sm:$0xf]
    %v51 = vld [vmem:[#allocation5 + $0x48] sm:$0xff]
    %v52 = vld [vmem:[#allocation5 + $0x50] sm:$0xf]
    %v53 = vld [vmem:[#allocation5 + $0x54] sm:$0xff]
    %v54 = vld [vmem:[#allocation5 + $0x5c] sm:$0xf]
    %v55 = vld [vmem:[#allocation5 + $0x60] sm:$0xff]
    %v56 = vld [vmem:[#allocation5 + $0x68] sm:$0xf]
    %v57 = vld [vmem:[#allocation5 + $0x6c] sm:$0xff]
    %v58 = vld [vmem:[#allocation5 + $0x74] sm:$0xf]
    %v59 = vld [vmem:[#allocation5 + $0x78] sm:$0xff]
    %v60 = vld [vmem:[#allocation5 + $0x80] sm:$0xf]
    %v61 = vld [vmem:[#allocation5 + $0x84] sm:$0xff]
    %v62 = vld [vmem:[#allocation5 + $0x8c] sm:$0xf]
    %v63 = vld [vmem:[#allocation5 + $0x90] sm:$0xff]
    %v64 = vld [vmem:[#allocation5 + $0x98] sm:$0xf]
    %v65 = vld [vmem:[#allocation5 + $0x9c] sm:$0xff]
    %v66 = vld [vmem:[#allocation5 + $0xa4] sm:$0xf]
    %v67 = vld [vmem:[#allocation5 + $0xa8] sm:$0xff]
    %v68 = vld [vmem:[#allocation5 + $0xb0] sm:$0xf]
    %v69 = vld [vmem:[#allocation5 + $0xb4] sm:$0xff]
    %v70 = vld [vmem:[#allocation5 + $0xbc] sm:$0xf]
    %v71 = vld [vmem:[#allocation5 + $0xc0] sm:$0xff]
    %v72 = vld [vmem:[#allocation5 + $0xc8] sm:$0xf]
    %v73 = vld [vmem:[#allocation5 + $0xcc] sm:$0xff]
    %v74 = vld [vmem:[#allocation5 + $0xd4] sm:$0xf]
    %v75 = vld [vmem:[#allocation5 + $0xd8] sm:$0xff]
    %v76 = vld [vmem:[#allocation5 + $0xe0] sm:$0xf]
    %v77 = vld [vmem:[#allocation5 + $0xe4] sm:$0xff]
    %v78 = vld [vmem:[#allocation5 + $0xec] sm:$0xf]
    %v79 = vld [vmem:[#allocation5 + $0xf0] sm:$0xff]
    %v80 = vld [vmem:[#allocation5 + $0xf8] sm:$0xf]
    %v81 = vld [vmem:[#allocation5 + $0xfc] sm:$0xff]
    %v82 = vld [vmem:[#allocation5 + $0x104] sm:$0xf]
    %v83 = vld [vmem:[#allocation5 + $0x108] sm:$0xff]
    %v84 = vld [vmem:[#allocation5 + $0x110] sm:$0xf]
    %v85 = vld [vmem:[#allocation5 + $0x114] sm:$0xff]
    %v86 = vld [vmem:[#allocation5 + $0x11c] sm:$0xf]
    %v87 = vld [vmem:[#allocation5 + $0x120] sm:$0xff]
    %v88 = vld [vmem:[#allocation5 + $0x128] sm:$0xf]
    %v89 = vld [vmem:[#allocation5 + $0x12c] sm:$0xff]
    %v90 = vld [vmem:[#allocation5 + $0x134] sm:$0xf]
    %v91 = vld [vmem:[#allocation5 + $0x138] sm:$0xff]
    %v92 = vld [vmem:[#allocation5 + $0x140] sm:$0xf]
    %v93 = vld [vmem:[#allocation5 + $0x144] sm:$0xff]
    %v94 = vld [vmem:[#allocation5 + $0x14c] sm:$0xf]
    %v95 = vld [vmem:[#allocation5 + $0x150] sm:$0xff]
    %v96 = vld [vmem:[#allocation5 + $0x158] sm:$0xf]
    %v97 = vld [vmem:[#allocation5 + $0x15c] sm:$0xff]
    %v98 = vld [vmem:[#allocation5 + $0x164] sm:$0xf]
    %v99 = vld [vmem:[#allocation5 + $0x168] sm:$0xff]
    %v100 = vld [vmem:[#allocation5 + $0x170] sm:$0xf]
    %v101 = vld [vmem:[#allocation5 + $0x174] sm:$0xff]
    %v102 = vld [vmem:[#allocation5 + $0x17c] sm:$0xf]
    %v103 = vld [vmem:[#allocation5 + $0x180] sm:$0xff]
    %v104 = vld [vmem:[#allocation5 + $0x188] sm:$0xf]
    %v105 = vld [vmem:[#allocation5 + $0x18c] sm:$0xff]
    %v106 = vld [vmem:[#allocation5 + $0x194] sm:$0xf]
    %v107 = vld [vmem:[#allocation5 + $0x198] sm:$0xff]
    %v108 = vld [vmem:[#allocation5 + $0x1a0] sm:$0xf]
    %v109 = vld [vmem:[#allocation5 + $0x1a4] sm:$0xff]
    %v110 = vld [vmem:[#allocation5 + $0x1ac] sm:$0xf]
    %v111 = vld [vmem:[#allocation5 + $0x1b0] sm:$0xff]
    %v112 = vld [vmem:[#allocation5 + $0x1b8] sm:$0xf]
    %v113 = vld [vmem:[#allocation5 + $0x1bc] sm:$0xff]
    %v114 = vld [vmem:[#allocation5 + $0x1c4] sm:$0xf]
    %v115 = vld [vmem:[#allocation5 + $0x1c8] sm:$0xff]
    %v116 = vld [vmem:[#allocation5 + $0x1d0] sm:$0xf]
    %v117 = vld [vmem:[#allocation5 + $0x1d4] sm:$0xff]
    %v118 = vld [vmem:[#allocation5 + $0x1dc] sm:$0xf]
    %v119 = vld [vmem:[#allocation5 + $0x1e0] sm:$0xff]
    %v120 = vld [vmem:[#allocation5 + $0x1e8] sm:$0xf]
    %v121 = vld [vmem:[#allocation5 + $0x1ec] sm:$0xff]
    %v122 = vld [vmem:[#allocation5 + $0x1f4] sm:$0xf]
    %v123 = vld [vmem:[#allocation5 + $0x1f8] sm:$0xff]
    %v124 = vld [vmem:[#allocation5 + $0x200] sm:$0xf]
    %v125 = vld [vmem:[#allocation5 + $0x204] sm:$0xff]
    %v126 = vld [vmem:[#allocation5 + $0x20c] sm:$0xf]
    %v127 = vld [vmem:[#allocation5 + $0x210] sm:$0xff]
    %v128 = vld [vmem:[#allocation5 + $0x218] sm:$0xf]
    %v129 = vld [vmem:[#allocation5 + $0x21c] sm:$0xff]
    %v130 = vld [vmem:[#allocation5 + $0x224] sm:$0xf]
    %v131 = vld [vmem:[#allocation5 + $0x228] sm:$0xff]
    %v132 = vld [vmem:[#allocation5 + $0x230] sm:$0xf]
    %v133 = vld [vmem:[#allocation5 + $0x234] sm:$0xff]
    %v134 = vld [vmem:[#allocation5 + $0x23c] sm:$0xf]
    %v135 = vld [vmem:[#allocation2] sm:$0x7]
    %v137 = vunpack.c.l.s4 1935823168
    %v138 = vunpack.c.0.s8 %v137
    %v139 = vlaneseq
    %v140 = vshrl.u32 %v139, 7
    %v141 = vsub.s32 %v138, %v140
    %v142 = vrot.slane %v135, %v141
    %v143 = vunpack.c.l.u8.bf16 %v142
    %v144 = vunpack.c.h.u8.bf16 %v142
    %v147 = vunpack.c.l.b16 %v143
    %v148 = vunpack.c.h.b16 %v143
    %v149 = vunpack.c.l.b16 %v144
    %v150 = vpack.c.b16 %v147, %v147
    %v151 = vpack.c.b16 %v148, %v148
    %v152 = vpack.c.b16 %v149, %v149
    %v252 = vunpack.c.l.b16 %v39
    %v253 = vunpack.c.h.b16 %v39
    %v254 = vunpack.c.l.b16 %v40
    %v255 = vunpack.c.l.b16 %v41
    %v256 = vunpack.c.h.b16 %v41
    %v257 = vunpack.c.l.b16 %v42
    %v258 = vunpack.c.l.b16 %v43
    %v259 = vunpack.c.h.b16 %v43
    %v260 = vunpack.c.l.b16 %v44
    %v261 = vunpack.c.l.b16 %v45
    %v262 = vunpack.c.h.b16 %v45
    %v263 = vunpack.c.l.b16 %v46
    %v264 = vunpack.c.l.b16 %v47
    %v265 = vunpack.c.h.b16 %v47
    %v266 = vunpack.c.l.b16 %v48
    %v267 = vunpack.c.l.b16 %v49
    %v268 = vunpack.c.h.b16 %v49
    %v269 = vunpack.c.l.b16 %v50
    %v270 = vunpack.c.l.b16 %v51
    %v271 = vunpack.c.h.b16 %v51
    %v272 = vunpack.c.l.b16 %v52
    %v273 = vunpack.c.l.b16 %v53
    %v274 = vunpack.c.h.b16 %v53
    %v275 = vunpack.c.l.b16 %v54
    %v276 = vunpack.c.l.b16 %v55
    %v277 = vunpack.c.h.b16 %v55
    %v278 = vunpack.c.l.b16 %v56
    %v279 = vunpack.c.l.b16 %v57
    %v280 = vunpack.c.h.b16 %v57
    %v281 = vunpack.c.l.b16 %v58
    %v282 = vunpack.c.l.b16 %v59
    %v283 = vunpack.c.h.b16 %v59
    %v284 = vunpack.c.l.b16 %v60
    %v285 = vunpack.c.l.b16 %v61
    %v286 = vunpack.c.h.b16 %v61
    %v287 = vunpack.c.l.b16 %v62
    %v288 = vunpack.c.l.b16 %v63
    %v289 = vunpack.c.h.b16 %v63
    %v290 = vunpack.c.l.b16 %v64
    %v291 = vunpack.c.l.b16 %v65
    %v292 = vunpack.c.h.b16 %v65
    %v293 = vunpack.c.l.b16 %v66
    %v294 = vunpack.c.l.b16 %v67
    %v295 = vunpack.c.h.b16 %v67
    %v296 = vunpack.c.l.b16 %v68
    %v297 = vunpack.c.l.b16 %v69
    %v298 = vunpack.c.h.b16 %v69
    %v299 = vunpack.c.l.b16 %v70
    %v300 = vunpack.c.l.b16 %v71
    %v301 = vunpack.c.h.b16 %v71
    %v302 = vunpack.c.l.b16 %v72
    %v303 = vunpack.c.l.b16 %v73
    %v304 = vunpack.c.h.b16 %v73
    %v305 = vunpack.c.l.b16 %v74
    %v306 = vunpack.c.l.b16 %v75
    %v307 = vunpack.c.h.b16 %v75
    %v308 = vunpack.c.l.b16 %v76
    %v309 = vunpack.c.l.b16 %v77
    %v310 = vunpack.c.h.b16 %v77
    %v311 = vunpack.c.l.b16 %v78
    %v312 = vunpack.c.l.b16 %v79
    %v313 = vunpack.c.h.b16 %v79
    %v314 = vunpack.c.l.b16 %v80
    %v315 = vunpack.c.l.b16 %v81
    %v316 = vunpack.c.h.b16 %v81
    %v317 = vunpack.c.l.b16 %v82
    %v318 = vunpack.c.l.b16 %v83
    %v319 = vunpack.c.h.b16 %v83
    %v320 = vunpack.c.l.b16 %v84
    %v321 = vunpack.c.l.b16 %v85
    %v322 = vunpack.c.h.b16 %v85
    %v323 = vunpack.c.l.b16 %v86
    %v324 = vunpack.c.l.b16 %v87
    %v325 = vunpack.c.h.b16 %v87
    %v326 = vunpack.c.l.b16 %v88
    %v327 = vunpack.c.l.b16 %v89
    %v328 = vunpack.c.h.b16 %v89
    %v329 = vunpack.c.l.b16 %v90
    %v330 = vunpack.c.l.b16 %v91
    %v331 = vunpack.c.h.b16 %v91
    %v332 = vunpack.c.l.b16 %v92
    %v333 = vunpack.c.l.b16 %v93
    %v334 = vunpack.c.h.b16 %v93
    %v335 = vunpack.c.l.b16 %v94
    %v336 = vunpack.c.l.b16 %v95
    %v337 = vunpack.c.h.b16 %v95
    %v338 = vunpack.c.l.b16 %v96
    %v339 = vunpack.c.l.b16 %v97
    %v340 = vunpack.c.h.b16 %v97
    %v341 = vunpack.c.l.b16 %v98
    %v342 = vunpack.c.l.b16 %v99
    %v343 = vunpack.c.h.b16 %v99
    %v344 = vunpack.c.l.b16 %v100
    %v345 = vunpack.c.l.b16 %v101
    %v346 = vunpack.c.h.b16 %v101
    %v347 = vunpack.c.l.b16 %v102
    %v348 = vunpack.c.l.b16 %v103
    %v349 = vunpack.c.h.b16 %v103
    %v350 = vunpack.c.l.b16 %v104
    %v351 = vunpack.c.l.b16 %v105
    %v352 = vunpack.c.h.b16 %v105
    %v353 = vunpack.c.l.b16 %v106
    %v354 = vunpack.c.l.b16 %v107
    %v355 = vunpack.c.h.b16 %v107
    %v356 = vunpack.c.l.b16 %v108
    %v357 = vunpack.c.l.b16 %v109
    %v358 = vunpack.c.h.b16 %v109
    %v359 = vunpack.c.l.b16 %v110
    %v360 = vunpack.c.l.b16 %v111
    %v361 = vunpack.c.h.b16 %v111
    %v362 = vunpack.c.l.b16 %v112
    %v363 = vunpack.c.l.b16 %v113
    %v364 = vunpack.c.h.b16 %v113
    %v365 = vunpack.c.l.b16 %v114
    %v366 = vunpack.c.l.b16 %v115
    %v367 = vunpack.c.h.b16 %v115
    %v368 = vunpack.c.l.b16 %v116
    %v369 = vunpack.c.l.b16 %v117
    %v370 = vunpack.c.h.b16 %v117
    %v371 = vunpack.c.l.b16 %v118
    %v372 = vunpack.c.l.b16 %v119
    %v373 = vunpack.c.h.b16 %v119
    %v374 = vunpack.c.l.b16 %v120
    %v375 = vunpack.c.l.b16 %v121
    %v376 = vunpack.c.h.b16 %v121
    %v377 = vunpack.c.l.b16 %v122
    %v378 = vunpack.c.l.b16 %v123
    %v379 = vunpack.c.h.b16 %v123
    %v380 = vunpack.c.l.b16 %v124
    %v381 = vunpack.c.l.b16 %v125
    %v382 = vunpack.c.h.b16 %v125
    %v383 = vunpack.c.l.b16 %v126
    %v384 = vunpack.c.l.b16 %v127
    %v385 = vunpack.c.h.b16 %v127
    %v386 = vunpack.c.l.b16 %v128
    %v387 = vunpack.c.l.b16 %v129
    %v388 = vunpack.c.h.b16 %v129
    %v389 = vunpack.c.l.b16 %v130
    %v390 = vunpack.c.l.b16 %v131
    %v391 = vunpack.c.h.b16 %v131
    %v392 = vunpack.c.l.b16 %v132
    %v393 = vunpack.c.l.b16 %v133
    %v394 = vunpack.c.h.b16 %v133
    %v395 = vunpack.c.l.b16 %v134
    %v396 = vpack.c.b16 %v255, %v252
    %v397 = vpack.c.b16 %v256, %v253
    %v398 = vpack.c.b16 %v257, %v254
    %v399 = vpack.c.b16 %v261, %v258
    %v400 = vpack.c.b16 %v262, %v259
    %v401 = vpack.c.b16 %v263, %v260
    %v402 = vpack.c.b16 %v267, %v264
    %v403 = vpack.c.b16 %v268, %v265
    %v404 = vpack.c.b16 %v269, %v266
    %v405 = vpack.c.b16 %v273, %v270
    %v406 = vpack.c.b16 %v274, %v271
    %v407 = vpack.c.b16 %v275, %v272
    %v408 = vpack.c.b16 %v279, %v276
    %v409 = vpack.c.b16 %v280, %v277
    %v410 = vpack.c.b16 %v281, %v278
    %v411 = vpack.c.b16 %v285, %v282
    %v412 = vpack.c.b16 %v286, %v283
    %v413 = vpack.c.b16 %v287, %v284
    %v414 = vpack.c.b16 %v291, %v288
    %v415 = vpack.c.b16 %v292, %v289
    %v416 = vpack.c.b16 %v293, %v290
    %v417 = vpack.c.b16 %v297, %v294
    %v418 = vpack.c.b16 %v298, %v295
    %v419 = vpack.c.b16 %v299, %v296
    %v420 = vpack.c.b16 %v303, %v300
    %v421 = vpack.c.b16 %v304, %v301
    %v422 = vpack.c.b16 %v305, %v302
    %v423 = vpack.c.b16 %v309, %v306
    %v424 = vpack.c.b16 %v310, %v307
    %v425 = vpack.c.b16 %v311, %v308
    %v426 = vpack.c.b16 %v315, %v312
    %v427 = vpack.c.b16 %v316, %v313
    %v428 = vpack.c.b16 %v317, %v314
    %v429 = vpack.c.b16 %v321, %v318
    %v430 = vpack.c.b16 %v322, %v319
    %v431 = vpack.c.b16 %v323, %v320
    %v432 = vpack.c.b16 %v327, %v324
    %v433 = vpack.c.b16 %v328, %v325
    %v434 = vpack.c.b16 %v329, %v326
    %v435 = vpack.c.b16 %v333, %v330
    %v436 = vpack.c.b16 %v334, %v331
    %v437 = vpack.c.b16 %v335, %v332
    %v438 = vpack.c.b16 %v339, %v336
    %v439 = vpack.c.b16 %v340, %v337
    %v440 = vpack.c.b16 %v341, %v338
    %v441 = vpack.c.b16 %v345, %v342
    %v442 = vpack.c.b16 %v346, %v343
    %v443 = vpack.c.b16 %v347, %v344
    %v444 = vpack.c.b16 %v351, %v348
    %v445 = vpack.c.b16 %v352, %v349
    %v446 = vpack.c.b16 %v353, %v350
    %v447 = vpack.c.b16 %v357, %v354
    %v448 = vpack.c.b16 %v358, %v355
    %v449 = vpack.c.b16 %v359, %v356
    %v450 = vpack.c.b16 %v363, %v360
    %v451 = vpack.c.b16 %v364, %v361
    %v452 = vpack.c.b16 %v365, %v362
    %v453 = vpack.c.b16 %v369, %v366
    %v454 = vpack.c.b16 %v370, %v367
    %v455 = vpack.c.b16 %v371, %v368
    %v456 = vpack.c.b16 %v375, %v372
    %v457 = vpack.c.b16 %v376, %v373
    %v458 = vpack.c.b16 %v377, %v374
    %v459 = vpack.c.b16 %v381, %v378
    %v460 = vpack.c.b16 %v382, %v379
    %v461 = vpack.c.b16 %v383, %v380
    %v462 = vpack.c.b16 %v387, %v384
    %v463 = vpack.c.b16 %v388, %v385
    %v464 = vpack.c.b16 %v389, %v386
    %v465 = vpack.c.b16 %v393, %v390
    %v466 = vpack.c.b16 %v394, %v391
    %v467 = vpack.c.b16 %v395, %v392
    %540 = vmatprep.subr.bf16.mxu0 %v397
    %541 = vmatpush1.bf16.msra.mxu0 %v396
    %542 = vmatprep.subr.bf16.mxu0 %v400
    %543 = vmatpush1.bf16.msra.mxu0 %v399
    %544 = vmatprep.subr.bf16.mxu0 %v403
    %545 = vmatpush1.bf16.msra.mxu0 %v402
    %546 = vmatprep.subr.bf16.mxu0 %v406
    %547 = vmatpush1.bf16.msra.mxu0 %v405
    %548 = vmatprep.subr.bf16.mxu0 %v409
    %549 = vmatpush1.bf16.msra.mxu0 %v408
    %550 = vmatprep.subr.bf16.mxu0 %v412
    %551 = vmatpush1.bf16.msra.mxu0 %v411
    %552 = vmatprep.subr.bf16.mxu0 %v415
    %553 = vmatpush1.bf16.msra.mxu0 %v414
    %554 = vmatprep.subr.bf16.mxu0 %v418
    %555 = vmatpush1.bf16.msra.mxu0 %v417
    %556 = vmatprep.subr.bf16.mxu0 %v421
    %557 = vmatpush1.bf16.msra.mxu0 %v420
    %558 = vmatprep.subr.bf16.mxu0 %v424
    %559 = vmatpush1.bf16.msra.mxu0 %v423
    %560 = vmatprep.subr.bf16.mxu0 %v427
    %561 = vmatpush1.bf16.msra.mxu0 %v426
    %562 = vmatprep.subr.bf16.mxu0 %v430
    %563 = vmatpush1.bf16.msra.mxu0 %v429
    %564 = vmatprep.subr.bf16.mxu0 %v433
    %565 = vmatpush1.bf16.msra.mxu0 %v432
    %566 = vmatprep.subr.bf16.mxu0 %v436
    %567 = vmatpush1.bf16.msra.mxu0 %v435
    %568 = vmatprep.subr.bf16.mxu0 %v439
    %569 = vmatpush1.bf16.msra.mxu0 %v438
    %570 = vmatprep.subr.bf16.mxu0 %v442
    %571 = vmatpush1.bf16.msra.mxu0 %v441
    %572 = vmatprep.mubr.bf16.mxu0 %v151
    %573 = vmatmul.mubr.bf16.gmra.mrb[0].mxu0 %v150
    %v574 = vpop.f32.mrb[0].mxu0
    %v575 = vadd.f32 0.0, %v574
    %v576 = vpop.f32.mrb[0].mxu0
    %v577 = vadd.f32 0.0, %v576
    %v578 = vpop.f32.mrb[0].mxu0
    %v579 = vpop.f32.mrb[0].mxu0
    %580 = vdwg.mxu0
    %581 = vmatprep.subr.bf16.mxu0 %v445
    %582 = vmatpush1.bf16.msra.mxu0 %v444
    %583 = vmatprep.subr.bf16.mxu0 %v448
    %584 = vmatpush1.bf16.msra.mxu0 %v447
    %585 = vmatprep.subr.bf16.mxu0 %v451
    %586 = vmatpush1.bf16.msra.mxu0 %v450
    %587 = vmatprep.subr.bf16.mxu0 %v454
    %588 = vmatpush1.bf16.msra.mxu0 %v453
    %589 = vmatprep.subr.bf16.mxu0 %v457
    %590 = vmatpush1.bf16.msra.mxu0 %v456
    %591 = vmatprep.subr.bf16.mxu0 %v460
    %592 = vmatpush1.bf16.msra.mxu0 %v459
    %593 = vmatprep.subr.bf16.mxu0 %v463
    %594 = vmatpush1.bf16.msra.mxu0 %v462
    %595 = vmatprep.subr.bf16.mxu0 %v466
    %596 = vmatpush1.bf16.msra.mxu0 %v465
    %597 = vmatprep.subr.bf16.mxu0 0
    %598 = vmatpush1.bf16.msra.mxu0 0
    %599 = vmatprep.subr.bf16.mxu0 0
    %600 = vmatpush1.bf16.msra.mxu0 0
    %601 = vmatprep.subr.bf16.mxu0 0
    %602 = vmatpush1.bf16.msra.mxu0 0
    %603 = vmatprep.subr.bf16.mxu0 0
    %604 = vmatpush1.bf16.msra.mxu0 0
    %605 = vmatprep.subr.bf16.mxu0 0
    %606 = vmatpush1.bf16.msra.mxu0 0
    %607 = vmatprep.subr.bf16.mxu0 0
    %608 = vmatpush1.bf16.msra.mxu0 0
    %609 = vmatprep.subr.bf16.mxu0 0
    %610 = vmatpush1.bf16.msra.mxu0 0
    %611 = vmatprep.subr.bf16.mxu0 0
    %612 = vmatpush1.bf16.msra.mxu0 0
    %613 = vmatprep.mubr.bf16.mxu0 0
    %614 = vmatmul.mubr.bf16.gmra.mrb[0].mxu0 %v152
    %v615 = vpop.f32.mrb[0].mxu0
    %v616 = vadd.f32 %v575, %v615
    %v617 = vpop.f32.mrb[0].mxu0
    %v618 = vadd.f32 %v577, %v617
    %v619 = vpop.f32.mrb[0].mxu0
    %v620 = vpop.f32.mrb[0].mxu0
    %621 = vdwg.mxu0
    %622 = vmatprep.subr.bf16.mxu0 0
    %623 = vmatpush1.bf16.msra.mxu0 %v398
    %624 = vmatprep.subr.bf16.mxu0 0
    %625 = vmatpush1.bf16.msra.mxu0 %v401
    %626 = vmatprep.subr.bf16.mxu0 0
    %627 = vmatpush1.bf16.msra.mxu0 %v404
    %628 = vmatprep.subr.bf16.mxu0 0
    %629 = vmatpush1.bf16.msra.mxu0 %v407
    %630 = vmatprep.subr.bf16.mxu0 0
    %631 = vmatpush1.bf16.msra.mxu0 %v410
    %632 = vmatprep.subr.bf16.mxu0 0
    %633 = vmatpush1.bf16.msra.mxu0 %v413
    %634 = vmatprep.subr.bf16.mxu0 0
    %635 = vmatpush1.bf16.msra.mxu0 %v416
    %636 = vmatprep.subr.bf16.mxu0 0
    %637 = vmatpush1.bf16.msra.mxu0 %v419
    %638 = vmatprep.subr.bf16.mxu0 0
    %639 = vmatpush1.bf16.msra.mxu0 %v422
    %640 = vmatprep.subr.bf16.mxu0 0
    %641 = vmatpush1.bf16.msra.mxu0 %v425
    %642 = vmatprep.subr.bf16.mxu0 0
    %643 = vmatpush1.bf16.msra.mxu0 %v428
    %644 = vmatprep.subr.bf16.mxu0 0
    %645 = vmatpush1.bf16.msra.mxu0 %v431
    %646 = vmatprep.subr.bf16.mxu0 0
    %647 = vmatpush1.bf16.msra.mxu0 %v434
    %648 = vmatprep.subr.bf16.mxu0 0
    %649 = vmatpush1.bf16.msra.mxu0 %v437
    %650 = vmatprep.subr.bf16.mxu0 0
    %651 = vmatpush1.bf16.msra.mxu0 %v440
    %652 = vmatprep.subr.bf16.mxu0 0
    %653 = vmatpush1.bf16.msra.mxu0 %v443
    %654 = vmatprep.mubr.bf16.mxu0 %v151
    %655 = vmatmul.mubr.bf16.gmra.mrb[0].mxu0 %v150
    %v656 = vpop.f32.mrb[0].mxu0
    %v657 = vadd.f32 0.0, %v656
    %v658 = vpop.f32.mrb[0].mxu0
    %v659 = vpop.f32.mrb[0].mxu0
    %v660 = vpop.f32.mrb[0].mxu0
    %661 = vdwg.mxu0
    %662 = vmatprep.subr.bf16.mxu0 0
    %663 = vmatpush1.bf16.msra.mxu0 %v446
    %664 = vmatprep.subr.bf16.mxu0 0
    %665 = vmatpush1.bf16.msra.mxu0 %v449
    %666 = vmatprep.subr.bf16.mxu0 0
    %667 = vmatpush1.bf16.msra.mxu0 %v452
    %668 = vmatprep.subr.bf16.mxu0 0
    %669 = vmatpush1.bf16.msra.mxu0 %v455
    %670 = vmatprep.subr.bf16.mxu0 0
    %671 = vmatpush1.bf16.msra.mxu0 %v458
    %672 = vmatprep.subr.bf16.mxu0 0
    %673 = vmatpush1.bf16.msra.mxu0 %v461
    %674 = vmatprep.subr.bf16.mxu0 0
    %675 = vmatpush1.bf16.msra.mxu0 %v464
    %676 = vmatprep.subr.bf16.mxu0 0
    %677 = vmatpush1.bf16.msra.mxu0 %v467
    %678 = vmatprep.subr.bf16.mxu0 0
    %679 = vmatpush1.bf16.msra.mxu0 0
    %680 = vmatprep.subr.bf16.mxu0 0
    %681 = vmatpush1.bf16.msra.mxu0 0
    %682 = vmatprep.subr.bf16.mxu0 0
    %683 = vmatpush1.bf16.msra.mxu0 0
    %684 = vmatprep.subr.bf16.mxu0 0
    %685 = vmatpush1.bf16.msra.mxu0 0
    %686 = vmatprep.subr.bf16.mxu0 0
    %687 = vmatpush1.bf16.msra.mxu0 0
    %688 = vmatprep.subr.bf16.mxu0 0
    %689 = vmatpush1.bf16.msra.mxu0 0
    %690 = vmatprep.subr.bf16.mxu0 0
    %691 = vmatpush1.bf16.msra.mxu0 0
    %692 = vmatprep.subr.bf16.mxu0 0
    %693 = vmatpush1.bf16.msra.mxu0 0
    %694 = vmatprep.mubr.bf16.mxu0 0
    %695 = vmatmul.mubr.bf16.gmra.mrb[0].mxu0 %v152
    %v696 = vpop.f32.mrb[0].mxu0
    %v697 = vadd.f32 %v657, %v696
    %v698 = vpop.f32.mrb[0].mxu0
    %v699 = vpop.f32.mrb[0].mxu0
    %v700 = vpop.f32.mrb[0].mxu0
    %701 = vdwg.mxu0
    %v702 = vmul.f32 %v616, 0.017124753
    %v703 = vadd.f32 %v702, -2.117904
    %704 = vst [vmem:[#allocation7] sm:$0x3] %v703
    %v705 = vmul.f32 %v618, 0.017507002
    %v706 = vadd.f32 %v705, -2.0357141
    %s707 = scalar_lea.vmem [#allocation7], 2
    %708 = vst [vmem:[%s707] sm:$0x3] %v706
    %v709 = vmul.f32 %v697, 0.017429193
    %v710 = vadd.f32 %v709, -1.8044444
    %s711 = scalar_lea.vmem [#allocation7], 4
    %712 = vst [vmem:[%s711] sm:$0x3] %v710
    // Predicated region
    $region18: #{tpu_custom_call.1} parent=1 // pred_check
      _
    $region19: #{tpu_custom_call.1} parent=1 // pred_check_branch
      %714 = sbr.rel (0) target = $region21
    $region20: #{tpu_custom_call.1} parent=1 // pred_region
      %s716 = ssub.s32 96, 96
      %717 = vsyncadd [#allocation4], %s716
      %s718 = sshll.u32 [#allocation7], 4
      %s719 = int_to_ptr.vmem [resolvable:$true] %s718
      %724 = dma.vmem_to_hbm [thread:$0]  %s719, 96, %s2, [#allocation4], 32, 32, 2
    $region21: #{tpu_custom_call.1} parent=1 // pred_fallthru
      _
    // Predicated region
    $region22: #{tpu_custom_call.1} parent=1 // pred_check
      _
    $region23: #{tpu_custom_call.1} parent=1 // pred_check_branch
      %726 = sbr.rel (0) target = $region25
    $region24: #{tpu_custom_call.1} parent=1 // pred_region
      %727 = dma.done [#allocation4], 96
    $region25: #{tpu_custom_call.1} parent=1 // pred_fallthru
      _
    %728 = vsyncpa [#allocation3], 1
    %729 = vsyncpa [#allocation6], 1
    %730 = vsyncpa [#allocation4], 1

</llo_original>
